<compile_context>
chip_gen: v5e
topology: v5e:2x2
jax: 0.10.0
libtpu: 0.0.40
codegen_flags: <defaults>
</compile_context>

<pallas_src>
import functools
import math

import jax
import jax.numpy as jnp
from jax.experimental import pallas as pl
from jax.experimental.pallas import tpu as pltpu


def _focal_hc_kernel(x_ref, t_ref, out_ref, *, num_class, gamma, lamda,
                     hw_tail):
    """One (b_n, C, t_hw) tile: classes on sublanes, samples on lanes."""
    x = x_ref[...].astype(jnp.float32)            # (b_n, C, T)
    tgt = t_ref[...].astype(jnp.int32)            # (b_n, 1, T) int8 -> int32

    # "gather at target" as a class-axis iota compare (no dynamic gather on TPU)
    ci = jax.lax.broadcasted_iota(jnp.int32, x.shape, 1)
    onehot = ci == tgt                            # (b_n, C, T) bool

    # numerically stable log-softmax pieces along the class (sublane) axis;
    # the full log-softmax tensor is never materialized (z is reused below).
    mx = jnp.max(x, axis=1, keepdims=True)        # (b_n, 1, T)
    z = x - mx                                    # (b_n, C, T)
    ez = jnp.exp(z)                               # (b_n, C, T)
    denom = jnp.sum(ez, axis=1, keepdims=True)    # (b_n, 1, T)
    log_denom = jnp.log(denom)                    # (b_n, 1, T)

    # logpt = log_softmax at the target class = z[target] - log(denom)
    z_t = jnp.sum(jnp.where(onehot, z, 0.0), axis=1, keepdims=True)
    logpt = z_t - log_denom                       # (b_n, 1, T)

    if gamma == 0.0:
        # (1 - pt - lamda*hard) ** 0 == 1 -> the hardness branch is dead work.
        loss = -logpt
    else:
        pt = jnp.exp(logpt)                       # (b_n, 1, T)
        one_m_pt = 1.0 - pt
        # po_norm * log(po_norm) on non-target classes, rewritten in log space:
        #   po_norm      = softmax / (1 - pt) = ez * scale
        #   log(po_norm) = logsm - log1p(-pt) = z - shift
        # -> one reciprocal + one log1p per *sample* instead of a per-class
        #    log, and only one live (C,T) temporary beyond z/ez.
        scale = pl.reciprocal(denom * one_m_pt, approx=True)   # EUP, not VALU
        shift = log_denom + jnp.log1p(-pt)        # (b_n, 1, T)
        ent = (ez * scale) * (z - shift)          # (b_n, C, T)
        # zero the target class (exact) and reproduce the reference isnan
        # fix-up (0 * inf when 1 - pt underflows to 0 in fp32).
        ent = jnp.where(jnp.logical_or(onehot, jnp.isnan(ent)), 0.0, ent)
        inv_ent_norm = 1.0 / math.log(1.0 / (float(num_class) - 1.0))
        hard = jnp.sum(ent, axis=1, keepdims=True) * inv_ent_norm
        base = one_m_pt - lamda * hard            # (b_n, 1, T)
        g_int = int(gamma)
        if float(g_int) == float(gamma) and 0 < g_int <= 4:
            w = base
            for _ in range(g_int - 1):            # small-integer gamma: no pow
                w = w * base
        else:
            # TODO(synk): non-integer gamma with base < 0 yields NaN, matching
            # the reference's pow; the integer fast path above does not.
            w = base ** gamma
        loss = -w * logpt                         # (b_n, 1, T)

    # per-tile partial sum -> lane 0 of a lane-dense (1, 1, 128) block
    lane = jax.lax.broadcasted_iota(jnp.int32, (1, 1, 128), 2)

    def _emit(val):
        out_ref[...] = jnp.where(lane == 0, jnp.sum(val), 0.0)

    if hw_tail is None:
        _emit(loss)
    else:
        # padded spatial lanes only exist in the last tile along grid axis 1
        j = pl.program_id(1)
        last_j = pl.num_programs(1) - 1

        @pl.when(j != last_j)
        def _():
            _emit(loss)

        @pl.when(j == last_j)
        def _():
            col = jax.lax.broadcasted_iota(jnp.int32, loss.shape, 2)
            _emit(jnp.where(col < hw_tail, loss, 0.0))


def focal_loss_hardness_calibrated(logits, target, *, gamma=0.0, lamda=0.01,
                                   size_average=False, max_tile=16384):
    """JAX/Pallas forward of FocalLossHardnessClibrated.

    logits: (N, C, H, W) (or (M, C)) float logits (f32 or bf16 -- the kernel
            upcasts in VMEM, so bf16 inputs halve the dominant HBM read).
    target: integer class labels, broadcastable to (N, H, W) / (M,).
    """
    x = jnp.asarray(logits)
    if x.ndim > 2:
        n, c = x.shape[0], x.shape[1]
        x = x.reshape(n, c, -1)                 # (N, C, HW): no transpose needed
    else:
        c = x.shape[1]
        x = x.T[None]                           # (1, C, M) (uncommon path)
        n = 1
    hw = x.shape[2]
    # labels fit in int8 (C <= 127): 1 B/sample of HBM traffic instead of 4 B
    t = jnp.asarray(target).reshape(n, 1, hw).astype(jnp.int8)

    # lane-dense spatial tile (multiple of 128), as large as reasonable while
    # keeping the (b_n, C, t_hw) logits tile comfortably inside VMEM.
    lane_cap = max(128, ((2 * 1024 * 1024) // max(c, 1)) // 128 * 128)
    step_lanes = min(int(max_tile), lane_cap)
    t_hw = min(step_lanes, pl.cdiv(hw, 128) * 128)
    hw_pad = pl.cdiv(hw, t_hw) * t_hw
    if hw_pad != hw:
        x = jnp.pad(x, ((0, 0), (0, 0), (0, hw_pad - hw)))
        t = jnp.pad(t, ((0, 0), (0, 0), (0, hw_pad - hw)))

    # When HW is small, batch several samples per grid step (amortizes the
    # ~0.35 us per-step overhead).  b_n is a divisor of N so no batch-axis
    # masking is needed.
    bn_cap = max(1, step_lanes // hw_pad)
    b_n = 1
    for d in range(min(n, bn_cap), 0, -1):
        if n % d == 0:
            b_n = d
            break

    num_nb = n // b_n
    num_hb = hw_pad // t_hw
    grid = (num_nb, num_hb)

    kernel = functools.partial(
        _focal_hc_kernel,
        num_class=c, gamma=float(gamma), lamda=float(lamda),
        hw_tail=(hw - (num_hb - 1) * t_hw) if hw_pad != hw else None)

    # Per-tile partial sums: the per-sample loss never round-trips through HBM.
    # TODO(synk): sweep pipeline_mode=pl.Buffered(3) on the logits spec for the
    # gamma==0 path if DMA issue latency shows up in profiles.
    partials = pl.pallas_call(
        kernel,
        out_shape=jax.ShapeDtypeStruct((num_nb, 1, num_hb * 128), jnp.float32),
        grid=grid,
        in_specs=[
            pl.BlockSpec((b_n, c, t_hw), lambda i, j: (i, 0, j)),   # logits
            pl.BlockSpec((b_n, 1, t_hw), lambda i, j: (i, 0, j)),   # targets
        ],
        out_specs=pl.BlockSpec((1, 1, 128), lambda i, j: (i, 0, j)),
        compiler_params=pltpu.CompilerParams(
            dimension_semantics=("parallel", "parallel")),
    )(x, t)

    total = jnp.sum(partials)
    if size_average:
        return total / jnp.float32(n * hw)
    return total


def _reference_jax(logits, target, gamma=0.0, lamda=0.01, size_average=False):
    """Pure-JAX transcription of the PyTorch forward (for verification)."""
    x = jnp.asarray(logits).astype(jnp.float32)
    n, c = x.shape[0], x.shape[1]
    x = x.reshape(n, c, -1).transpose(0, 2, 1).reshape(-1, c)
    t = jnp.asarray(target).reshape(-1).astype(jnp.int32)
    logsm = jax.nn.log_softmax(x, axis=-1)
    logpt = jnp.take_along_axis(logsm, t[:, None], axis=1)[:, 0]
    pt = jnp.exp(logpt)
    sm = jax.nn.softmax(x, axis=-1)
    onehot = jax.nn.one_hot(t, c, dtype=jnp.float32)
    po = sm * (1.0 - onehot)
    po_norm = po / (1.0 - pt)[:, None]
    po_ent = po_norm * jnp.log(po_norm)
    po_ent = jnp.where(jnp.isnan(po_ent), 0.0, po_ent)
    hard = po_ent.sum(-1) / jnp.log(1.0 / (c - 1.0))
    loss = -1.0 * (1.0 - pt - lamda * hard) ** gamma * logpt
    return loss.mean() if size_average else loss.sum()


if __name__ == "__main__":
    key = jax.random.PRNGKey(0)
    k1, k2, k3, k4 = jax.random.split(key, 4)

    # main case: C = 10 (as hard-coded by the reference), 16x16 spatial
    N, C, H, W = 2, 10, 16, 16
    logits = jax.random.normal(k1, (N, C, H, W), dtype=jnp.float32)
    target = jax.random.randint(k2, (N, H, W), 0, C, dtype=jnp.int32)

    for g in (0.0, 2.0):
        out = focal_loss_hardness_calibrated(logits, target, gamma=g,
                                             lamda=0.01, size_average=False)
        out = jax.block_until_ready(out)
        ref = _reference_jax(logits, target, gamma=g, lamda=0.01,
                             size_average=False)
        # gamma != 0 path uses an approximate (EUP) reciprocal for the
        # hardness-term normalization -> slightly looser tolerance.
        rtol = 1e-4 if g == 0.0 else 1e-3
        assert jnp.allclose(out, ref, rtol=rtol, atol=1e-3), (g, out, ref)

    # ragged spatial size to exercise the lane-padding / last-tile mask path
    H2, W2 = 7, 9
    logits2 = jax.random.normal(k3, (N, C, H2, W2), dtype=jnp.float32)
    target2 = jax.random.randint(k4, (N, H2, W2), 0, C, dtype=jnp.int32)
    out2 = focal_loss_hardness_calibrated(logits2, target2, gamma=2.0,
                                          lamda=0.01, size_average=True)
    out2 = jax.block_until_ready(out2)
    ref2 = _reference_jax(logits2, target2, gamma=2.0, lamda=0.01,
                          size_average=True)
    assert jnp.allclose(out2, ref2, rtol=1e-3, atol=1e-3), (out2, ref2)

    print("KERNEL_OK")
</pallas_src>

<mosaic_0001>
module attributes {stable_mosaic.version = 11 : i64} {
  func.func @_focal_hc_kernel(%arg0: i32, %arg1: i32, %arg2: memref<2x10x256xf32, #tpu.memory_space<vmem>>, %arg3: memref<2x1x256xi8, #tpu.memory_space<vmem>>, %arg4: memref<1x1x128xf32, #tpu.memory_space<vmem>>) attributes {dimension_semantics = [#tpu.dimension_semantics<parallel>, #tpu.dimension_semantics<parallel>], iteration_bounds = array<i64: 1, 1>, scalar_prefetch = 0 : i64, scratch_operands = 0 : i64, tpu.core_type = #tpu.core_type<tc>, window_params = [{transform_indices = @transform_0, window_bounds = array<i64: 2, 10, 256>}, {transform_indices = @transform_1, window_bounds = array<i64: 2, 1, 256>}, {transform_indices = @transform_2, window_bounds = array<i64: 1, 1, 128>}]} {
    %c0 = arith.constant 0 : index
    %c0_0 = arith.constant 0 : index
    %c0_1 = arith.constant 0 : index
    %0 = vector.load %arg2[%c0, %c0_0, %c0_1] : memref<2x10x256xf32, #tpu.memory_space<vmem>>, vector<2x10x256xf32>
    %c0_2 = arith.constant 0 : index
    %c0_3 = arith.constant 0 : index
    %c0_4 = arith.constant 0 : index
    %1 = vector.load %arg3[%c0_2, %c0_3, %c0_4] : memref<2x1x256xi8, #tpu.memory_space<vmem>>, vector<2x1x256xi8>
    %2 = arith.extsi %1 : vector<2x1x256xi8> to vector<2x1x256xi32>
    %3 = tpu.iota {dimensions = array<i32: 1>} : vector<2x10x256xi32>
    %4 = vector.broadcast %2 : vector<2x1x256xi32> to vector<2x10x256xi32>
    %5 = arith.cmpi eq, %3, %4 : vector<2x10x256xi32>
    %cst = arith.constant dense<0xFF800000> : vector<2x256xf32>
    %6 = vector.multi_reduction <maximumf>, %0, %cst [1] : vector<2x10x256xf32> to vector<2x256xf32>
    %7 = vector.shape_cast %6 : vector<2x256xf32> to vector<2x1x256xf32>
    %8 = vector.broadcast %7 : vector<2x1x256xf32> to vector<2x10x256xf32>
    %9 = arith.subf %0, %8 : vector<2x10x256xf32>
    %10 = math.exp %9 : vector<2x10x256xf32>
    %cst_5 = arith.constant dense<0.000000e+00> : vector<2x256xf32>
    %11 = vector.multi_reduction <add>, %10, %cst_5 [1] : vector<2x10x256xf32> to vector<2x256xf32>
    %12 = vector.shape_cast %11 : vector<2x256xf32> to vector<2x1x256xf32>
    %13 = math.log %12 : vector<2x1x256xf32>
    %cst_6 = arith.constant 0.000000e+00 : f32
    %14 = vector.broadcast %cst_6 : f32 to vector<2x10x256xf32>
    %15 = arith.select %5, %9, %14 : vector<2x10x256xi1>, vector<2x10x256xf32>
    %cst_7 = arith.constant dense<0.000000e+00> : vector<2x256xf32>
    %16 = vector.multi_reduction <add>, %15, %cst_7 [1] : vector<2x10x256xf32> to vector<2x256xf32>
    %17 = vector.shape_cast %16 : vector<2x256xf32> to vector<2x1x256xf32>
    %18 = arith.subf %17, %13 : vector<2x1x256xf32>
    %cst_8 = arith.constant 0.000000e+00 : f32
    %19 = vector.broadcast %cst_8 : f32 to vector<2x1x256xf32>
    %20 = arith.subf %19, %18 : vector<2x1x256xf32>
    %21 = tpu.iota {dimensions = array<i32: 2>} : vector<1x1x128xi32>
    %c0_i32 = arith.constant 0 : i32
    %22 = vector.broadcast %c0_i32 : i32 to vector<1x1x128xi32>
    %23 = arith.cmpi eq, %21, %22 : vector<1x1x128xi32>
    %24 = vector.shape_cast %20 : vector<2x1x256xf32> to vector<1x2x1x256xf32>
    %cst_9 = arith.constant dense<0.000000e+00> : vector<1xf32>
    %25 = vector.multi_reduction <add>, %24, %cst_9 [1, 2, 3] : vector<1x2x1x256xf32> to vector<1xf32>
    %26 = vector.shape_cast %25 : vector<1xf32> to vector<1x1x1x1xf32>
    %27 = vector.extract %26[0, 0, 0, 0] : f32 from vector<1x1x1x1xf32>
    %cst_10 = arith.constant 0.000000e+00 : f32
    %28 = vector.broadcast %27 : f32 to vector<1x1x128xf32>
    %29 = vector.broadcast %cst_10 : f32 to vector<1x1x128xf32>
    %30 = arith.select %23, %28, %29 : vector<1x1x128xi1>, vector<1x1x128xf32>
    %c0_11 = arith.constant 0 : index
    %c0_12 = arith.constant 0 : index
    %c0_13 = arith.constant 0 : index
    %31 = vector.load %arg4[%c0_11, %c0_12, %c0_13] : memref<1x1x128xf32, #tpu.memory_space<vmem>>, vector<1x1x128xf32>
    tpu.vector_store %arg4[%c0_11, %c0_12, %c0_13], %30 {strides = array<i32>} : memref<1x1x128xf32, #tpu.memory_space<vmem>>, vector<1x1x128xf32>,
    return
  }
  func.func @transform_0(%arg0: i32, %arg1: i32) -> (i32, i32, i32) {
    %c0_i32 = arith.constant 0 : i32
    %c0_i32_0 = arith.constant 0 : i32
    return %arg0, %c0_i32, %arg1 : i32, i32, i32
  }
  func.func @transform_1(%arg0: i32, %arg1: i32) -> (i32, i32, i32) {
    %c0_i32 = arith.constant 0 : i32
    %c0_i32_0 = arith.constant 0 : i32
    return %arg0, %c0_i32, %arg1 : i32, i32, i32
  }
  func.func @transform_2(%arg0: i32, %arg1: i32) -> (i32, i32, i32) {
    %c0_i32 = arith.constant 0 : i32
    %c0_i32_0 = arith.constant 0 : i32
    return %arg0, %c0_i32, %arg1 : i32, i32, i32
  }
}

</mosaic_0001>

<llo_original>
// kernel: tpu_custom_call.1
$region0: #{tpu_custom_call.1}
  #allocation0 [shape = 'u32[]', space=smem, size = 0x4, offset = 0x4, fixed_abs, tag = 'smem constant byte address 0x4 - core index']
  #allocation1 [shape = 'u32[72,128]{1,0:T(1,128)}', space=vmem, size = 0x9000, scoped, tag = 'internal scratch']
  %s0 = inlined_call_operand.vmem [shape: f32[2,10,256], index: 0, kind: input, shape index: {}]
  %s1 = inlined_call_operand.vmem [shape: s8[2,1,256], index: 1, kind: input, shape index: {}]
  %s2 = inlined_call_operand.hbm [shape: f32[1,1,128], index: 2, kind: output, shape index: {}]
  %s3 = sld [smem:[#allocation0]]
  $region18: #{tpu_custom_call.1} parent=0
    _
  %s5 = ssub.s32 1, %s3
  %s6 = scalar_select 0, %s5, %s3
  $region1: #{tpu_custom_call.1} parent=0
    #allocation2 [shape = 'u8[512]{0}', space=vmem, size = 0x400, scoped, tag = 'output window, operand 0, single buffered']
    #allocation3 [shape = 's32[1]{0}', space=sflag, size = 0x4, scoped, tag = 'scoped memory for tpu_custom_call.1']
    %7 = vsyncpa [#allocation3], 0
    // Predicated region
    $region2: #{tpu_custom_call.1} parent=1 // pred_check
      _
    $region3: #{tpu_custom_call.1} parent=1 // pred_check_branch
      %9 = sbr.rel (0) target = $region5
    $region4: #{tpu_custom_call.1} parent=1 // pred_region
      _
    $region5: #{tpu_custom_call.1} parent=1 // pred_fallthru
      _
    // Predicated region
    $region6: #{tpu_custom_call.1} parent=1 // pred_check
      _
    $region7: #{tpu_custom_call.1} parent=1 // pred_check_branch
      %11 = sbr.rel (0) target = $region9
    $region8: #{tpu_custom_call.1} parent=1 // pred_region
      _
    $region9: #{tpu_custom_call.1} parent=1 // pred_fallthru
      _
    %v12 = vld [vmem:[%s0] sm:$0xff]
    %v13 = vld [vmem:[%s0 + $0x8] sm:$0xff]
    %v14 = vld [vmem:[%s0 + $0x10] sm:$0x3]
    %v15 = vld [vmem:[%s0 + $0x18] sm:$0x3]
    %v16 = vld [vmem:[%s0 + $0x20] sm:$0xff]
    %v17 = vld [vmem:[%s0 + $0x28] sm:$0xff]
    %v18 = vld [vmem:[%s0 + $0x30] sm:$0x3]
    %v19 = vld [vmem:[%s0 + $0x38] sm:$0x3]
    %v20 = vld [vmem:[%s1] sm:$0x3]
    %v21 = vld [vmem:[%s1 + $0x2] sm:$0x3]
    %v22 = vunpack.c.0.s8 %v20
    %v23 = vunpack.c.0.s8 %v21
    %v24 = vlaneseq
    %v25 = vshrl.u32 %v24, 7
    %v26 = vadd.s32 %v25, 8
    %v27 = vperm.slane %v22, 0
    %v28 = vperm.slane %v22, 4
    %v29 = vperm.slane %v23, 0
    %v30 = vperm.slane %v23, 4
    %v31 = vperm.slane %v27, 0
    %v32 = vperm.slane %v28, 0
    %v33 = vperm.slane %v29, 0
    %v34 = vperm.slane %v30, 0
    %vm35 = vcmp.eq.s32.totalorder %v25, %v31
    %vm36 = vcmp.eq.s32.totalorder %v25, %v32
    %vm37 = vcmp.eq.s32.totalorder %v26, %v31
    %vm38 = vcmp.eq.s32.totalorder %v26, %v32
    %vm39 = vcmp.eq.s32.totalorder %v25, %v33
    %vm40 = vcmp.eq.s32.totalorder %v25, %v34
    %vm41 = vcmp.eq.s32.totalorder %v26, %v33
    %vm42 = vcmp.eq.s32.totalorder %v26, %v34
    %vm43 = vcmask 1041408
    %v44 = vsel %vm43, %v14, -inf
    %v45 = vmax.f32 %v12, %v44
    %v46 = vrot.slane %v45, 4
    %v47 = vmax.f32 %v45, %v46
    %v48 = vrot.slane %v47, 2
    %v49 = vmax.f32 %v47, %v48
    %v50 = vrot.slane %v49, 1
    %v51 = vmax.f32 %v49, %v50
    %v52 = vsel %vm43, %v15, -inf
    %v53 = vmax.f32 %v13, %v52
    %v54 = vrot.slane %v53, 4
    %v55 = vmax.f32 %v53, %v54
    %v56 = vrot.slane %v55, 2
    %v57 = vmax.f32 %v55, %v56
    %v58 = vrot.slane %v57, 1
    %v59 = vmax.f32 %v57, %v58
    %v60 = vsel %vm43, %v18, -inf
    %v61 = vmax.f32 %v16, %v60
    %v62 = vrot.slane %v61, 4
    %v63 = vmax.f32 %v61, %v62
    %v64 = vrot.slane %v63, 2
    %v65 = vmax.f32 %v63, %v64
    %v66 = vrot.slane %v65, 1
    %v67 = vmax.f32 %v65, %v66
    %v68 = vsel %vm43, %v19, -inf
    %v69 = vmax.f32 %v17, %v68
    %v70 = vrot.slane %v69, 4
    %v71 = vmax.f32 %v69, %v70
    %v72 = vrot.slane %v71, 2
    %v73 = vmax.f32 %v71, %v72
    %v74 = vrot.slane %v73, 1
    %v75 = vmax.f32 %v73, %v74
    %v76 = vsub.f32 %v12, %v51
    %v77 = vsub.f32 %v13, %v59
    %v78 = vsub.f32 %v14, %v51
    %v79 = vsub.f32 %v15, %v59
    %v80 = vsub.f32 %v16, %v67
    %v81 = vsub.f32 %v17, %v75
    %v82 = vsub.f32 %v18, %v67
    %v83 = vsub.f32 %v19, %v75
    %v84 = vmul.f32 %v76, 1.442695
    %v85 = vpow.pop %v84
    %v86 = vmul.f32 %v77, 1.442695
    %v87 = vpow.pop %v86
    %v88 = vmul.f32 %v78, 1.442695
    %v89 = vpow.pop %v88
    %v90 = vmul.f32 %v79, 1.442695
    %v91 = vpow.pop %v90
    %v92 = vmul.f32 %v80, 1.442695
    %v93 = vpow.pop %v92
    %v94 = vmul.f32 %v81, 1.442695
    %v95 = vpow.pop %v94
    %v96 = vmul.f32 %v82, 1.442695
    %v97 = vpow.pop %v96
    %v98 = vmul.f32 %v83, 1.442695
    %v99 = vpow.pop %v98
    %v100 = vsel %vm43, %v89, 0.0
    %v101 = vadd.f32 %v85, %v100
    %v102 = vrot.slane %v101, 4
    %v103 = vadd.f32 %v101, %v102
    %v104 = vrot.slane %v103, 2
    %v105 = vadd.f32 %v103, %v104
    %v106 = vrot.slane %v105, 1
    %v107 = vadd.f32 %v105, %v106
    %v108 = vsel %vm43, %v91, 0.0
    %v109 = vadd.f32 %v87, %v108
    %v110 = vrot.slane %v109, 4
    %v111 = vadd.f32 %v109, %v110
    %v112 = vrot.slane %v111, 2
    %v113 = vadd.f32 %v111, %v112
    %v114 = vrot.slane %v113, 1
    %v115 = vadd.f32 %v113, %v114
    %v116 = vsel %vm43, %v97, 0.0
    %v117 = vadd.f32 %v93, %v116
    %v118 = vrot.slane %v117, 4
    %v119 = vadd.f32 %v117, %v118
    %v120 = vrot.slane %v119, 2
    %v121 = vadd.f32 %v119, %v120
    %v122 = vrot.slane %v121, 1
    %v123 = vadd.f32 %v121, %v122
    %v124 = vsel %vm43, %v99, 0.0
    %v125 = vadd.f32 %v95, %v124
    %v126 = vrot.slane %v125, 4
    %v127 = vadd.f32 %v125, %v126
    %v128 = vrot.slane %v127, 2
    %v129 = vadd.f32 %v127, %v128
    %v130 = vrot.slane %v129, 1
    %v131 = vadd.f32 %v129, %v130
    %v132 = vlog2.pop %v107
    %v133 = vmul.f32 %v132, 0.6931472
    %v134 = vlog2.pop %v115
    %v135 = vmul.f32 %v134, 0.6931472
    %v136 = vlog2.pop %v123
    %v137 = vmul.f32 %v136, 0.6931472
    %v138 = vlog2.pop %v131
    %v139 = vmul.f32 %v138, 0.6931472
    %v140 = vsel %vm35, %v76, 0.0
    %v141 = vsel %vm36, %v77, 0.0
    %v142 = vsel %vm37, %v78, 0.0
    %v143 = vsel %vm38, %v79, 0.0
    %v144 = vsel %vm39, %v80, 0.0
    %v145 = vsel %vm40, %v81, 0.0
    %v146 = vsel %vm41, %v82, 0.0
    %v147 = vsel %vm42, %v83, 0.0
    %v148 = vsel %vm43, %v142, 0.0
    %v149 = vadd.f32 %v140, %v148
    %v150 = vrot.slane %v149, 4
    %v151 = vadd.f32 %v149, %v150
    %v152 = vrot.slane %v151, 2
    %v153 = vadd.f32 %v151, %v152
    %v154 = vrot.slane %v153, 1
    %v155 = vadd.f32 %v153, %v154
    %v156 = vsel %vm43, %v143, 0.0
    %v157 = vadd.f32 %v141, %v156
    %v158 = vrot.slane %v157, 4
    %v159 = vadd.f32 %v157, %v158
    %v160 = vrot.slane %v159, 2
    %v161 = vadd.f32 %v159, %v160
    %v162 = vrot.slane %v161, 1
    %v163 = vadd.f32 %v161, %v162
    %v164 = vsel %vm43, %v146, 0.0
    %v165 = vadd.f32 %v144, %v164
    %v166 = vrot.slane %v165, 4
    %v167 = vadd.f32 %v165, %v166
    %v168 = vrot.slane %v167, 2
    %v169 = vadd.f32 %v167, %v168
    %v170 = vrot.slane %v169, 1
    %v171 = vadd.f32 %v169, %v170
    %v172 = vsel %vm43, %v147, 0.0
    %v173 = vadd.f32 %v145, %v172
    %v174 = vrot.slane %v173, 4
    %v175 = vadd.f32 %v173, %v174
    %v176 = vrot.slane %v175, 2
    %v177 = vadd.f32 %v175, %v176
    %v178 = vrot.slane %v177, 1
    %v179 = vadd.f32 %v177, %v178
    %v180 = vsub.f32 %v155, %v133
    %v181 = vsub.f32 %v163, %v135
    %v182 = vsub.f32 %v171, %v137
    %v183 = vsub.f32 %v179, %v139
    %v184 = vsub.f32 0.0, %v180
    %v185 = vsub.f32 0.0, %v181
    %v186 = vsub.f32 0.0, %v182
    %v187 = vsub.f32 0.0, %v183
    %v188 = vlaneseq
    %v189 = vand.u32 %v188, 127
    %vm190 = vcmp.eq.s32.totalorder %v189, 0
    %vm191 = vcmask 1040384
    %v192 = vsel %vm191, %v184, 0.0
    %v193 = vsel %vm191, %v185, 0.0
    %v194 = vadd.f32 %v192, %v193
    %v195 = vsel %vm191, %v186, 0.0
    %v196 = vadd.f32 %v194, %v195
    %v197 = vsel %vm191, %v187, 0.0
    %v198 = vadd.f32 %v196, %v197
    %199 = vadd.xlane.f32.xlu0 %v198
    %v200 = vpop.xlane.xlu0 %199
    %v201 = vrot.slane %v200, 4
    %v202 = vadd.f32 %v200, %v201
    %v203 = vrot.slane %v202, 2
    %v204 = vadd.f32 %v202, %v203
    %v205 = vrot.slane %v204, 1
    %v206 = vadd.f32 %v204, %v205
    %s207 = vtos %v206
    %v208 = vstv %s207
    %v209 = vsel %vm190, %v208, 0.0
    %210 = vst [vmem:[#allocation2] sm:$0x1] %v209
    // Predicated region
    $region10: #{tpu_custom_call.1} parent=1 // pred_check
      _
    $region11: #{tpu_custom_call.1} parent=1 // pred_check_branch
      %212 = sbr.rel (0) target = $region13
    $region12: #{tpu_custom_call.1} parent=1 // pred_region
      %214 = vsyncadd [#allocation3], 0
      %s216 = sshll.u32 [#allocation2], 4
      %s217 = int_to_ptr.vmem [resolvable:$true] %s216
      %s218 = sshll.u32 %s2, 4
      %s219 = int_to_ptr.hbm [resolvable:$true] %s218
      %221 = dma.vmem_to_hbm [thread:$0]  %s217, 16, %s219, [#allocation3]
    $region13: #{tpu_custom_call.1} parent=1 // pred_fallthru
      _
    // Predicated region
    $region14: #{tpu_custom_call.1} parent=1 // pred_check
      _
    $region15: #{tpu_custom_call.1} parent=1 // pred_check_branch
      %223 = sbr.rel (0) target = $region17
    $region16: #{tpu_custom_call.1} parent=1 // pred_region
      %225 = dma.done [#allocation3], 16
    $region17: #{tpu_custom_call.1} parent=1 // pred_fallthru
      _
    %226 = vsyncpa [#allocation3], 1

</llo_original>
